<compile_context>
chip_gen: v6e
topology: v6e:2x2x1
jax: 0.10.0
libtpu: 0.0.40
codegen_flags: <defaults>
</compile_context>

<pallas_src>
import jax
import jax.numpy as jnp
from jax.experimental import pallas as pl
from jax.experimental.pallas import tpu as pltpu

_LANE = 128
_TARGET_BLOCK_BYTES = 4 * 1024 * 1024  # ~4 MiB/block; 2 bufs x (in+out) < 24 MiB (v7x-safe)


def _one_one_conv_kernel(w_ref, x_ref, o_ref):
    # w_ref: (C, C)        conv weight, resident across the whole grid
    # x_ref: (C, TILE_HW)  one sample's channel-major tile, spatial on lanes
    # o_ref: (C, TILE_HW)
    o_ref[...] = jnp.dot(
        w_ref[...], x_ref[...], preferred_element_type=jnp.float32
    ).astype(o_ref.dtype)


def one_one_conv_pallas(x_nchw, weight):
    """Apply an invertible 1x1 conv.

    x_nchw : (N, C, H, W)
    weight : (C, C)   (y = W @ x per pixel)
    returns: (y_nchw, log_det) with y_nchw (N, C, H, W), log_det (N,)
    """
    N, C, H, W = x_nchw.shape
    HW = H * W
    itemsize = jnp.dtype(x_nchw.dtype).itemsize

    # Lane-dense spatial tile: multiple of 128, sized toward ~4 MiB per block,
    # capped at the (128-rounded) spatial extent.
    max_tile = max(_LANE, (_TARGET_BLOCK_BYTES // (C * itemsize)) // _LANE * _LANE)
    hw_ceil = pl.cdiv(HW, _LANE) * _LANE
    tile_hw = min(max_tile, hw_ceil)
    hw_pad = pl.cdiv(HW, tile_hw) * tile_hw

    # Free reshape (NCHW layout already has spatial contiguous last).
    x3 = x_nchw.reshape(N, C, HW)
    if hw_pad != HW:
        x3 = jnp.pad(x3, ((0, 0), (0, 0), (0, hw_pad - HW)))

    w = weight.astype(x_nchw.dtype)

    grid = (N, hw_pad // tile_hw)

    cost = pl.CostEstimate(
        flops=2 * N * HW * C * C,
        transcendentals=0,
        bytes_accessed=2 * N * HW * C * itemsize + C * C * itemsize,
    )

    y3 = pl.pallas_call(
        _one_one_conv_kernel,
        out_shape=jax.ShapeDtypeStruct((N, C, hw_pad), x_nchw.dtype),
        grid_spec=pltpu.PrefetchScalarGridSpec(
            num_scalar_prefetch=0,
            grid=grid,
            in_specs=[
                # W stays resident (same block for every grid step).
                pl.BlockSpec((C, C), lambda n, t: (0, 0)),
                # x: one sample, full channel dim, lane-dense spatial tile.
                pl.BlockSpec((None, C, tile_hw), lambda n, t: (n, 0, t)),
            ],
            out_specs=pl.BlockSpec((None, C, tile_hw), lambda n, t: (n, 0, t)),
        ),
        compiler_params=pltpu.CompilerParams(
            dimension_semantics=("parallel", "parallel"),
            vmem_limit_bytes=32 * 1024 * 1024,
        ),
        cost_estimate=cost,
    )(w, x3)

    if hw_pad != HW:
        y3 = y3[:, :, :HW]
    y_nchw = y3.reshape(N, C, H, W)

    # TODO(synk): log|det(W)| is a tiny C x C scalar reduction with no clean
    # Pallas equivalent; computed in plain JAX.
    _, logabsdet = jnp.linalg.slogdet(weight)
    log_det = jnp.full((N,), H * W * logabsdet, dtype=x_nchw.dtype)

    return y_nchw, log_det


def make_weight(key, num_channels):
    """Deterministic orthogonal (rotation) init, as in Glow/RealNVP 1x1 conv."""
    a = jax.random.normal(key, (num_channels, num_channels), dtype=jnp.float32)
    q, _ = jnp.linalg.qr(a)
    return q.astype(jnp.float32)


if __name__ == "__main__":
    key = jax.random.PRNGKey(0)
    k_x, k_w = jax.random.split(key)

    N, C, H, W = 2, 4, 16, 16  # NCHW, as in PyTorch
    x = jax.random.normal(k_x, (N, C, H, W), dtype=jnp.float32)
    weight = make_weight(k_w, C)

    y, log_det = one_one_conv_pallas(x, weight)
    jax.block_until_ready((y, log_det))

    # Sanity check against a plain-JAX reference (einsum = 1x1 conv).
    y_ref = jnp.einsum("oc,nchw->nohw", weight, x)
    assert jnp.allclose(y, y_ref, atol=1e-5, rtol=1e-5), "mismatch vs reference"
    assert y.shape == (N, C, H, W) and log_det.shape == (N,)

    print("KERNEL_OK")
</pallas_src>

<mosaic_0001>
module attributes {stable_mosaic.version = 11 : i64} {
  func.func @_one_one_conv_kernel(%arg0: i32, %arg1: i32, %arg2: memref<4x4xf32, #tpu.memory_space<vmem>>, %arg3: memref<1x4x256xf32, #tpu.memory_space<vmem>>, %arg4: memref<1x4x256xf32, #tpu.memory_space<vmem>>) attributes {dimension_semantics = [#tpu.dimension_semantics<parallel>, #tpu.dimension_semantics<parallel>], iteration_bounds = array<i64: 2, 1>, scalar_prefetch = 0 : i64, scratch_operands = 0 : i64, tpu.core_type = #tpu.core_type<tc>, window_params = [{pipeline_mode = #tpu.pipeline_mode<synchronous>, transform_indices = @transform_0, window_bounds = array<i64: 4, 4>}, {transform_indices = @transform_1, window_bounds = array<i64: 1, 4, 256>}, {transform_indices = @transform_2, window_bounds = array<i64: 1, 4, 256>}]} {
    %c0 = arith.constant 0 : index
    %c0_0 = arith.constant 0 : index
    %0 = vector.load %arg2[%c0, %c0_0] : memref<4x4xf32, #tpu.memory_space<vmem>>, vector<4x4xf32>
    %c0_1 = arith.constant 0 : index
    %c0_2 = arith.constant 0 : index
    %c0_3 = arith.constant 0 : index
    %1 = vector.load %arg3[%c0_1, %c0_2, %c0_3] : memref<1x4x256xf32, #tpu.memory_space<vmem>>, vector<1x4x256xf32>
    %2 = vector.shape_cast %1 : vector<1x4x256xf32> to vector<4x256xf32>
    %cst = arith.constant dense<0.000000e+00> : vector<4x256xf32>
    %3 = tpu.matmul %0, %2, %cst {dimension_numbers = #tpu.dot_dimension_numbers<[1], [0], [0], [1], [0, 0, 1, 1], [], []>} : vector<4x4xf32>, vector<4x256xf32>, vector<4x256xf32> -> vector<4x256xf32>
    %c0_4 = arith.constant 0 : index
    %c0_5 = arith.constant 0 : index
    %c0_6 = arith.constant 0 : index
    %4 = vector.load %arg4[%c0_4, %c0_5, %c0_6] : memref<1x4x256xf32, #tpu.memory_space<vmem>>, vector<1x4x256xf32>
    %5 = vector.shape_cast %4 : vector<1x4x256xf32> to vector<4x256xf32>
    %6 = vector.shape_cast %3 : vector<4x256xf32> to vector<1x4x256xf32>
    tpu.vector_store %arg4[%c0_4, %c0_5, %c0_6], %6 {strides = array<i32>} : memref<1x4x256xf32, #tpu.memory_space<vmem>>, vector<1x4x256xf32>,
    return
  }
  func.func @transform_0(%arg0: i32, %arg1: i32) -> (i32, i32) {
    %c0_i32 = arith.constant 0 : i32
    %c0_i32_0 = arith.constant 0 : i32
    %c0_i32_1 = arith.constant 0 : i32
    return %c0_i32, %c0_i32_0 : i32, i32
  }
  func.func @transform_1(%arg0: i32, %arg1: i32) -> (i32, i32, i32) {
    %c0_i32 = arith.constant 0 : i32
    %c0_i32_0 = arith.constant 0 : i32
    return %arg0, %c0_i32, %arg1 : i32, i32, i32
  }
  func.func @transform_2(%arg0: i32, %arg1: i32) -> (i32, i32, i32) {
    %c0_i32 = arith.constant 0 : i32
    %c0_i32_0 = arith.constant 0 : i32
    return %arg0, %c0_i32, %arg1 : i32, i32, i32
  }
}

</mosaic_0001>

<llo_original>
// kernel: tpu_custom_call.1
$region0: #{tpu_custom_call.1}
  #allocation0 [shape = 'u32[]', space=smem, size = 0x4, offset = 0x4, fixed_abs, tag = 'smem constant byte address 0x4 - core index']
  #allocation1 [shape = 'u32[144,128]{1,0:T(1,128)}', space=vmem, size = 0x12000, scoped, tag = 'internal scratch']
  %s0 = inlined_call_operand.hbm [shape: f32[4,4], index: 0, kind: input, shape index: {}]
  %s1 = inlined_call_operand.hbm [shape: f32[2,4,256], index: 1, kind: input, shape index: {}]
  %s2 = inlined_call_operand.hbm [shape: f32[2,4,256], index: 2, kind: output, shape index: {}]
  %s3 = sld [smem:[#allocation0]]
  $region49: #{tpu_custom_call.1} parent=0
    _
  %s5 = ssub.s32 1, %s3
  %s6 = scalar_select 0, %s5, %s3
  $region1: #{tpu_custom_call.1} parent=0
    #allocation2 [shape = 'u8[2048]{0}', space=vmem, size = 0x800, scoped, tag = 'input window, operand 0, single buffered']
    #allocation3 [shape = 's32[2]{0}', space=sflag, size = 0x8, scoped, tag = 'scoped memory for tpu_custom_call.1']
    #allocation4 [shape = 's32[2]{0}', space=sflag, size = 0x8, scoped, tag = 'scoped memory for tpu_custom_call.1']
    #allocation5 [shape = 'u8[8192]{0}', space=vmem, size = 0x2000, scoped, tag = 'input window, operand 1']
    #allocation6 [shape = 's32[2]{0}', space=sflag, size = 0x8, scoped, tag = 'scoped memory for tpu_custom_call.1']
    #allocation7 [shape = 'u8[8192]{0}', space=vmem, size = 0x2000, scoped, tag = 'output window, operand 0']
    %7 = vsyncpa [#allocation3], 0
    %8 = vsyncpa [#allocation6], 0
    %s9 = scalar_lea.sflag [#allocation6], 1
    %10 = vsyncpa %s9, 0
    %11 = vsyncpa [#allocation4], 0
    %s12 = scalar_lea.sflag [#allocation4], 1
    %13 = vsyncpa %s12, 0
    loop: start=0, step=1, limit=4
    $region2: #{tpu_custom_call.1} parent=1 // loop_pre_header
      _
    $region3: #{tpu_custom_call.1} parent=1 // loop_header
      %s15 = sphi 0, %s19
      %p16 = scmp.ge.s32.totalorder %s15, 4
      %s22 = sphi 0, %s34
      %s23 = sphi 0, %s30
      %s24 = sphi 0, %s22
      %s25 = sphi 0, %s23
      %s26 = sphi 0, %s24
      %s27 = sphi 0, %s25
      %s35 = sphi 0, %s35
      %s37 = sphi 0, %s35
      %s38 = sphi 0, %s37
      %s52 = sphi 0, %s38
      %s60 = sphi 0, %s62
      %s63 = sphi 0, %s60
      %s64 = sphi 0, %s63
      %s80 = sphi 0, %s64
      %s88 = sphi 0, %s90
      %s91 = sphi 0, %s88
      %s92 = sphi 0, %s91
      %s108 = sphi 0, %s92
    $region4: #{tpu_custom_call.1} parent=1 // loop_header_branch
      %18 = sbr.rel (%p16) target = $region8
    $region5: #{tpu_custom_call.1} parent=1 // loop_body
      %s20 = ssub.s32 %s15, 1
      %s21 = ssub.s32 %s15, 2
      %s28 = sadd.s32 1, %s23
      %p29 = scmp.ge.s32.totalorder %s28, 1
      %s30 = scalar_select %p29, 0, %s28
      %s31 = sadd.s32 1, %s22
      %s32 = scalar_select %p29, %s31, %s22
      %p33 = scmp.ge.s32.totalorder %s32, 2
      %s34 = scalar_select %p33, 0, %s32
      %s36 = sadd.s32 %s35, 1
      %p39 = scmp.eq.s32.totalorder %s15, 1
      %p40 = scmp.ne.s32.totalorder %s35, %s37
      %p41 = scmp.eq.s32.totalorder %s15, 0
      %p42 = por %p40, %p41
      %p43 = scmp.ne.s32.totalorder %s35, %s37
      %p44 = scmp.eq.s32.totalorder %s20, 1
      %p45 = por %p43, %p44
      %p46 = scmp.ne.s32.totalorder %s37, %s38
      %p47 = scmp.eq.s32.totalorder %s20, 0
      %p48 = por %p46, %p47
      %p49 = scmp.ne.s32.totalorder %s37, %s38
      %p50 = scmp.eq.s32.totalorder %s21, 1
      %p51 = por %p49, %p50
      %p53 = scmp.ne.s32.totalorder %s38, %s52
      %p54 = scmp.eq.s32.totalorder %s21, 0
      %p55 = por %p53, %p54
      %s56 = ssub.s32 %s22, %s34
      %s57 = ssub.s32 %s23, %s30
      %s58 = sor.u32 %s56, %s57
      %p59 = scmp.eq.s32.totalorder %s58, 0
      %s61 = sadd.s32 %s60, 1
      %s62 = scalar_select %p59, %s60, %s61
      %p65 = pneg %p59
      %p66 = scmp.eq.s32.totalorder %s15, 1
      %p67 = por %p65, %p66
      %p68 = scmp.ne.s32.totalorder %s60, %s63
      %p69 = scmp.eq.s32.totalorder %s15, 0
      %p70 = por %p68, %p69
      %p71 = scmp.ne.s32.totalorder %s60, %s63
      %p72 = scmp.eq.s32.totalorder %s20, 1
      %p73 = por %p71, %p72
      %p74 = scmp.ne.s32.totalorder %s63, %s64
      %p75 = scmp.eq.s32.totalorder %s20, 0
      %p76 = por %p74, %p75
      %p77 = scmp.ne.s32.totalorder %s63, %s64
      %p78 = scmp.eq.s32.totalorder %s21, 1
      %p79 = por %p77, %p78
      %p81 = scmp.ne.s32.totalorder %s64, %s80
      %p82 = scmp.eq.s32.totalorder %s21, 0
      %p83 = por %p81, %p82
      %s84 = ssub.s32 %s22, %s34
      %s85 = ssub.s32 %s23, %s30
      %s86 = sor.u32 %s84, %s85
      %p87 = scmp.eq.s32.totalorder %s86, 0
      %s89 = sadd.s32 %s88, 1
      %s90 = scalar_select %p87, %s88, %s89
      %p93 = pneg %p87
      %p94 = scmp.eq.s32.totalorder %s15, 1
      %p95 = por %p93, %p94
      %p96 = scmp.ne.s32.totalorder %s88, %s91
      %p97 = scmp.eq.s32.totalorder %s15, 0
      %p98 = por %p96, %p97
      %p99 = scmp.ne.s32.totalorder %s88, %s91
      %p100 = scmp.eq.s32.totalorder %s20, 1
      %p101 = por %p99, %p100
      %p102 = scmp.ne.s32.totalorder %s91, %s92
      %p103 = scmp.eq.s32.totalorder %s20, 0
      %p104 = por %p102, %p103
      %p105 = scmp.ne.s32.totalorder %s91, %s92
      %p106 = scmp.eq.s32.totalorder %s21, 1
      %p107 = por %p105, %p106
      %p109 = scmp.ne.s32.totalorder %s92, %s108
      %p110 = scmp.eq.s32.totalorder %s21, 0
      %p111 = por %p109, %p110
      %p112 = scmp.le.s32.totalorder 1, %s15
      %p113 = scmp.lt.s32.totalorder %s15, 3
      %p114 = pnand %p112, %p113
      %p115 = pneg %p114
      // Predicated region
      $region9: #{tpu_custom_call.1} parent=5 // pred_check
        _
      $region10: #{tpu_custom_call.1} parent=5 // pred_check_branch
        %117 = sbr.rel (%p114) target = $region12
      $region11: #{tpu_custom_call.1} parent=5 // pred_region
        %s118 = ssub.s32 %s15, 1
        // Predicated region
        $region13: #{tpu_custom_call.1} parent=11 // pred_check
          %p119 = pneg %p48
        $region14: #{tpu_custom_call.1} parent=11 // pred_check_branch
          %121 = sbr.rel (%p119) target = $region16
        $region15: #{tpu_custom_call.1} parent=11 // pred_region
          %s123 = ssub.s32 64, 64
          %124 = vsyncadd [#allocation3], %s123
          %s126 = sshll.u32 [#allocation2], 4
          %s127 = int_to_ptr.vmem [resolvable:$true] %s126
          %129 = dma.hbm_to_vmem [thread:$0]  %s0, 64, %s127, [#allocation3]
        $region16: #{tpu_custom_call.1} parent=11 // pred_fallthru
          _
      $region12: #{tpu_custom_call.1} parent=5 // pred_fallthru
        _
      %p130 = scmp.lt.s32.totalorder %s15, 2
      // Predicated region
      $region17: #{tpu_custom_call.1} parent=5 // pred_check
        %p131 = pneg %p130
      $region18: #{tpu_custom_call.1} parent=5 // pred_check_branch
        %133 = sbr.rel (%p131) target = $region20
      $region19: #{tpu_custom_call.1} parent=5 // pred_region
        // Predicated region
        $region21: #{tpu_custom_call.1} parent=19 // pred_check
          %p134 = pneg %p70
        $region22: #{tpu_custom_call.1} parent=19 // pred_check_branch
          %136 = sbr.rel (%p134) target = $region24
        $region23: #{tpu_custom_call.1} parent=19 // pred_region
          %s137 = sand.u32 %s60, 1
          %s138 = scalar_lea.sflag [#allocation6], %s137
          %s139 = sand.u32 %s60, 1
          %s140 = smul.addr %s139, 8
          %s141 = scalar_lea.vmem [#allocation5], %s140
          %s142 = smul.u32 2, %s23
          %s144 = ssub.s32 128, 128
          %145 = vsyncadd %s138, %s144
          %s146 = smul.addr %s22, 2
          %s147 = sadd.s32 %s142, %s146
          %s148 = smul.addr %s147, 64
          %s149 = scalar_lea.hbm %s1, %s148
          %s151 = sshll.u32 %s141, 4
          %s152 = int_to_ptr.vmem [resolvable:$true] %s151
          %154 = dma.hbm_to_vmem [thread:$0]  %s149, 128, %s152, %s138
        $region24: #{tpu_custom_call.1} parent=19 // pred_fallthru
          _
      $region20: #{tpu_custom_call.1} parent=5 // pred_fallthru
        _
      %p155 = scmp.le.s32.totalorder 1, %s15
      %p156 = scmp.lt.s32.totalorder %s15, 3
      %p157 = pnand %p155, %p156
      %p158 = pneg %p157
      // Predicated region
      $region25: #{tpu_custom_call.1} parent=5 // pred_check
        _
      $region26: #{tpu_custom_call.1} parent=5 // pred_check_branch
        %160 = sbr.rel (%p157) target = $region28
      $region27: #{tpu_custom_call.1} parent=5 // pred_region
        %s161 = ssub.s32 %s15, 1
        // Predicated region
        $region29: #{tpu_custom_call.1} parent=27 // pred_check
          %p162 = pneg %p48
        $region30: #{tpu_custom_call.1} parent=27 // pred_check_branch
          %164 = sbr.rel (%p162) target = $region32
        $region31: #{tpu_custom_call.1} parent=27 // pred_region
          %165 = dma.done [#allocation3], 64
        $region32: #{tpu_custom_call.1} parent=27 // pred_fallthru
          _
        %s166 = sand.u32 %s63, 1
        %s167 = scalar_lea.sflag [#allocation6], %s166
        %s168 = sand.u32 %s63, 1
        %s169 = smul.addr %s168, 8
        %s170 = scalar_lea.vmem [#allocation5], %s169
        // Predicated region
        $region33: #{tpu_custom_call.1} parent=27 // pred_check
          %p171 = pneg %p76
        $region34: #{tpu_custom_call.1} parent=27 // pred_check_branch
          %173 = sbr.rel (%p171) target = $region36
        $region35: #{tpu_custom_call.1} parent=27 // pred_region
          %174 = dma.done %s167, 128
        $region36: #{tpu_custom_call.1} parent=27 // pred_fallthru
          _
        %p175 = pneg %p48
        %p176 = pneg %p45
        %s177 = sand.u32 %s63, 1
        %s178 = scalar_lea.sflag [#allocation6], %s177
        %s179 = sand.u32 %s63, 1
        %s180 = smul.addr %s179, 8
        %s181 = scalar_lea.vmem [#allocation5], %s180
        %p182 = pneg %p76
        %p183 = pneg %p73
        %p184 = pneg %p104
        %p185 = pneg %p101
        %s186 = sand.u32 %s91, 1
        %s187 = scalar_lea.sflag [#allocation4], %s186
        %s188 = sand.u32 %s91, 1
        %s189 = smul.addr %s188, 8
        %s190 = scalar_lea.vmem [#allocation7], %s189
        %s191 = smul.u32 2, %s25
        %s192 = smul.u32 2, %s25
        %v193 = vld [vmem:[#allocation2] sm:$0xf]
        %v194 = vld [vmem:[%s170] sm:$0xff]
        %v196 = vcombine.high %v194, %v194
        %vm197 = vcmask 31744
        %v199 = vsel %vm197, %v193, 0
        %vm201 = vcmask 1043456
        %v202 = vsel %vm201, %v194, 0
        %v204 = vsel %vm201, %v196, 0
        %206 = vmatprep.subr.mxu0 0.0
        %207 = vmatpush1.msra.mxu0 0.0
        %208 = vmatprep.subr.mxu0 0.0
        %209 = vmatpush1.msra.mxu0 0.0
        %210 = vmatprep.subr.mxu0 0.0
        %211 = vmatpush1.msra.mxu0 0.0
        %212 = vmatprep.subr.mxu0 0.0
        %213 = vmatpush1.msra.mxu0 0.0
        %214 = vmatprep.subr.mxu0 0.0
        %215 = vmatpush1.msra.mxu0 0.0
        %216 = vmatprep.subr.mxu0 0.0
        %217 = vmatpush1.msra.mxu0 0.0
        %218 = vmatprep.subr.mxu0 0.0
        %219 = vmatpush1.msra.mxu0 0.0
        %220 = vmatprep.subr.mxu0 0.0
        %221 = vmatpush1.msra.mxu0 0.0
        %222 = vmatprep.subr.mxu0 0.0
        %223 = vmatpush1.msra.mxu0 0.0
        %224 = vmatprep.subr.mxu0 0.0
        %225 = vmatpush1.msra.mxu0 0.0
        %226 = vmatprep.subr.mxu0 0.0
        %227 = vmatpush1.msra.mxu0 0.0
        %228 = vmatprep.subr.mxu0 0.0
        %229 = vmatpush1.msra.mxu0 0.0
        %230 = vmatprep.subr.mxu0 0.0
        %231 = vmatpush1.msra.mxu0 0.0
        %232 = vmatprep.subr.mxu0 0.0
        %233 = vmatpush1.msra.mxu0 0.0
        %234 = vmatprep.subr.mxu0 0.0
        %235 = vmatpush1.msra.mxu0 0.0
        %236 = vmatprep.subr.mxu0 %v204
        %237 = vmatpush1.msra.mxu0 %v202
        %238 = vmatprep.subr.mxu0 0.0
        %239 = vmatpush2.msra.mxu0 0.0
        %240 = vmatprep.subr.mxu0 0.0
        %241 = vmatpush2.msra.mxu0 0.0
        %242 = vmatprep.subr.mxu0 0.0
        %243 = vmatpush2.msra.mxu0 0.0
        %244 = vmatprep.subr.mxu0 0.0
        %245 = vmatpush2.msra.mxu0 0.0
        %246 = vmatprep.subr.mxu0 0.0
        %247 = vmatpush2.msra.mxu0 0.0
        %248 = vmatprep.subr.mxu0 0.0
        %249 = vmatpush2.msra.mxu0 0.0
        %250 = vmatprep.subr.mxu0 0.0
        %251 = vmatpush2.msra.mxu0 0.0
        %252 = vmatprep.subr.mxu0 0.0
        %253 = vmatpush2.msra.mxu0 0.0
        %254 = vmatprep.subr.mxu0 0.0
        %255 = vmatpush2.msra.mxu0 0.0
        %256 = vmatprep.subr.mxu0 0.0
        %257 = vmatpush2.msra.mxu0 0.0
        %258 = vmatprep.subr.mxu0 0.0
        %259 = vmatpush2.msra.mxu0 0.0
        %260 = vmatprep.subr.mxu0 0.0
        %261 = vmatpush2.msra.mxu0 0.0
        %262 = vmatprep.subr.mxu0 0.0
        %263 = vmatpush2.msra.mxu0 0.0
        %264 = vmatprep.subr.mxu0 0.0
        %265 = vmatpush2.msra.mxu0 0.0
        %266 = vmatprep.subr.mxu0 0.0
        %267 = vmatpush2.msra.mxu0 0.0
        %268 = vmatprep.subr.mxu0 0.0
        %269 = vmatpush2.msra.mxu0 0.0
        %270 = vmatprep.mubr.f32.mxu0 0.0
        %271 = vmatmul.mubr.f32.gmra.mxu0 %v199
        %v272 = vpop.f32.mrf.mxu0
        %v273 = vadd.f32 0.0, %v272
        %v274 = vpop.f32.mrf.mxu0
        %v275 = vadd.f32 0.0, %v274
        %276 = vdwg.mxu0
        %v279 = vcombine.low %v273, %v275
        %281 = vst [vmem:[%s190] sm:$0xff] %v279
        %s282 = sand.u32 %s91, 1
        %s283 = scalar_lea.sflag [#allocation4], %s282
        %s284 = sand.u32 %s91, 1
        %s285 = smul.addr %s284, 8
        %s286 = scalar_lea.vmem [#allocation7], %s285
        // Predicated region
        $region37: #{tpu_custom_call.1} parent=27 // pred_check
          %p287 = pneg %p101
        $region38: #{tpu_custom_call.1} parent=27 // pred_check_branch
          %289 = sbr.rel (%p287) target = $region40
        $region39: #{tpu_custom_call.1} parent=27 // pred_region
          %s290 = smul.u32 2, %s25
          %s292 = ssub.s32 128, 128
          %293 = vsyncadd %s283, %s292
          %s294 = smul.addr %s24, 2
          %s295 = sadd.s32 %s290, %s294
          %s296 = smul.addr %s295, 64
          %s297 = scalar_lea.hbm %s2, %s296
          %s299 = sshll.u32 %s286, 4
          %s300 = int_to_ptr.vmem [resolvable:$true] %s299
          %302 = dma.vmem_to_hbm [thread:$0]  %s300, 128, %s297, %s283
        $region40: #{tpu_custom_call.1} parent=27 // pred_fallthru
          _
      $region28: #{tpu_custom_call.1} parent=5 // pred_fallthru
        _
      %p303 = scmp.le.s32.totalorder 2, %s15
      // Predicated region
      $region41: #{tpu_custom_call.1} parent=5 // pred_check
        %p304 = pneg %p303
      $region42: #{tpu_custom_call.1} parent=5 // pred_check_branch
        %306 = sbr.rel (%p304) target = $region44
      $region43: #{tpu_custom_call.1} parent=5 // pred_region
        %s307 = ssub.s32 %s15, 2
        // Predicated region
        $region45: #{tpu_custom_call.1} parent=43 // pred_check
          %p308 = pneg %p107
        $region46: #{tpu_custom_call.1} parent=43 // pred_check_branch
          %310 = sbr.rel (%p308) target = $region48
        $region47: #{tpu_custom_call.1} parent=43 // pred_region
          %s311 = sand.u32 %s92, 1
          %s312 = scalar_lea.sflag [#allocation4], %s311
          %s313 = sand.u32 %s92, 1
          %s314 = smul.addr %s313, 8
          %s315 = scalar_lea.vmem [#allocation7], %s314
          %316 = dma.done %s312, 128
        $region48: #{tpu_custom_call.1} parent=43 // pred_fallthru
          _
      $region44: #{tpu_custom_call.1} parent=5 // pred_fallthru
        _
    $region6: #{tpu_custom_call.1} parent=1 // loop_footer
      %s19 = sadd.s32 1, %s15
    $region7: #{tpu_custom_call.1} parent=1 // loop_footer_branch
      %14 = sbr.rel target = $region3
    $region8: #{tpu_custom_call.1} parent=1 // loop_exit
      _
    %317 = vsyncpa [#allocation3], 1
    %s318 = scalar_lea.sflag [#allocation3], 1
    %319 = vsyncpa %s318, 1
    %320 = vsyncpa [#allocation6], 1
    %s321 = scalar_lea.sflag [#allocation6], 1
    %322 = vsyncpa %s321, 1
    %323 = vsyncpa [#allocation4], 1
    %s324 = scalar_lea.sflag [#allocation4], 1
    %325 = vsyncpa %s324, 1

</llo_original>
